<compile_context>
chip_gen: v7x
topology: tpu7x:2x2x1
jax: 0.10.0
libtpu: 0.0.40
codegen_flags: <defaults>
</compile_context>

<pallas_src>
import jax
import jax.numpy as jnp
from jax import lax
from jax.experimental import pallas as pl
from jax.experimental.pallas import tpu as pltpu


def _embed_gather_kernel(ids_ref, table_ref, out_ref):
    # ids_ref   : [TM, 1] int32 token ids for this tile (VMEM).
    # table_ref : [V, D]  full embedding table, VMEM-resident across the grid
    #             (index_map returns the same block every step).
    # out_ref   : [TM, D] output tile.
    ids = ids_ref[...]                                   # [TM, 1]
    tm = ids.shape[0]
    v = table_ref.shape[0]
    # One-hot row gather on the MXU: one_hot[t, j] = (ids[t] == j).
    iota = lax.broadcasted_iota(jnp.int32, (tm, v), 1)   # [TM, V]
    one_hot = (ids == iota).astype(table_ref.dtype)      # lane-broadcast compare
    out_ref[...] = jnp.dot(
        one_hot, table_ref[...], preferred_element_type=jnp.float32
    ).astype(out_ref.dtype)


def glove_embedding_lookup(ids, table, *, tm=256):
    """Gather rows of `table` [V, D] at integer `ids` [B, L] -> [B, L, D].

    tm = tokens per grid step (multiple of 256 keeps the MXU M dim filled on
    v6e/v7x; 256 is plenty for the VMEM budget on every generation).
    """
    B, L = ids.shape
    V, D = table.shape
    N = B * L

    # Pad token count up to a multiple of TM; padded slots use id 0 and the
    # corresponding output rows are sliced off below.
    n_pad = ((N + tm - 1) // tm) * tm
    flat = ids.reshape(N).astype(jnp.int32)
    flat = jnp.pad(flat, (0, n_pad - N))
    ids2d = flat.reshape(n_pad, 1)            # [N_pad, 1]: ids along sublanes

    out_flat = pl.pallas_call(
        _embed_gather_kernel,
        out_shape=jax.ShapeDtypeStruct((n_pad, D), table.dtype),
        grid_spec=pltpu.PrefetchScalarGridSpec(
            num_scalar_prefetch=0,
            grid=(n_pad // tm,),
            in_specs=[
                # ids tile for this step
                pl.BlockSpec((tm, 1), lambda i: (i, 0)),
                # full table, same block every step -> stays resident in VMEM
                pl.BlockSpec((V, D), lambda i: (0, 0)),
            ],
            out_specs=pl.BlockSpec((tm, D), lambda i: (i, 0)),
        ),
        compiler_params=pltpu.CompilerParams(
            dimension_semantics=("parallel",),   # independent tiles; v7x 2-TC
        ),
    )(ids2d, table)

    return out_flat[:N].reshape(B, L, D)


# ---------------------------------------------------------------------------
# Python-side glue replicating get_glove()'s tokenization / padding logic.
# (string -> id mapping has no Pallas equivalent; it stays host-side.)
# ---------------------------------------------------------------------------
def sentences_to_ids(sentence_lists, word2id, vocab_size, *, length_bucket=1):
    """word->id + pad to max_len with id = vocab_size-1 (PyTorch convention).

    length_bucket > 1 rounds the padded length up to a bucket so that the
    kernel sees a capped set of shapes (avoids a recompile per distinct
    max_len); default 1 preserves the original module's exact output shape.
    """
    max_len = max(len(s) for s in sentence_lists)
    max_len = ((max_len + length_bucket - 1) // length_bucket) * length_bucket
    ids = [
        [word2id.get(w, 0) for w in s] + [vocab_size - 1] * (max_len - len(s))
        for s in sentence_lists
    ]
    return jnp.asarray(ids, dtype=jnp.int32)


if __name__ == "__main__":
    # Deterministic synthetic "GloVe" setup (args.vocab_size / args.glove_dim)
    vocab_size = 32
    glove_dim = 128

    key = jax.random.PRNGKey(0)
    glove_table = jax.random.normal(key, (vocab_size, glove_dim), dtype=jnp.float32)

    # Deterministic word2id vocabulary (ids 1..vocab_size-2; 0 = <unk>,
    # vocab_size-1 = <pad>, matching the module's padding convention).
    vocab_words = [f"w{i}" for i in range(1, vocab_size - 1)]
    word2id = {w: i + 1 for i, w in enumerate(vocab_words)}

    # Two small sentences (batch=2), different lengths, one OOV word.
    sentence_lists = [
        ["w1", "w2", "w3", "zzz_unknown", "w5"],              # len 5
        ["w6", "w7", "w8", "w9", "w10", "w11", "w12", "w13"], # len 8 -> max_len
    ]

    ids = sentences_to_ids(sentence_lists, word2id, vocab_size)   # [2, 8] int32

    emb = glove_embedding_lookup(ids, glove_table)                # [2, 8, 128]
    emb = jax.block_until_ready(emb)

    # Reference check against a plain JAX gather (one-hot matmul is an exact copy).
    ref = jnp.take(glove_table, ids, axis=0)
    assert emb.shape == (len(sentence_lists), ids.shape[1], glove_dim)
    assert jnp.allclose(emb, ref), "Pallas embedding gather mismatch"

    print("KERNEL_OK")
</pallas_src>

<mosaic_0001>
module attributes {stable_mosaic.version = 11 : i64} {
  func.func @_embed_gather_kernel(%arg0: i32, %arg1: memref<256x1xi32, #tpu.memory_space<vmem>>, %arg2: memref<32x128xf32, #tpu.memory_space<vmem>>, %arg3: memref<256x128xf32, #tpu.memory_space<vmem>>) attributes {dimension_semantics = [#tpu.dimension_semantics<parallel>], iteration_bounds = array<i64: 1>, scalar_prefetch = 0 : i64, scratch_operands = 0 : i64, tpu.core_type = #tpu.core_type<tc>, window_params = [{transform_indices = @transform_0, window_bounds = array<i64: 256, 1>}, {pipeline_mode = #tpu.pipeline_mode<synchronous>, transform_indices = @transform_1, window_bounds = array<i64: 32, 128>}, {transform_indices = @transform_2, window_bounds = array<i64: 256, 128>}]} {
    %c0 = arith.constant 0 : index
    %c0_0 = arith.constant 0 : index
    %0 = vector.load %arg1[%c0, %c0_0] : memref<256x1xi32, #tpu.memory_space<vmem>>, vector<256x1xi32>
    %1 = tpu.iota {dimensions = array<i32: 1>} : vector<256x32xi32>
    %2 = vector.broadcast %0 : vector<256x1xi32> to vector<256x32xi32>
    %3 = arith.cmpi eq, %2, %1 : vector<256x32xi32>
    %4 = arith.extui %3 : vector<256x32xi1> to vector<256x32xi32>
    %5 = arith.sitofp %4 : vector<256x32xi32> to vector<256x32xf32>
    %c0_1 = arith.constant 0 : index
    %c0_2 = arith.constant 0 : index
    %6 = vector.load %arg2[%c0_1, %c0_2] : memref<32x128xf32, #tpu.memory_space<vmem>>, vector<32x128xf32>
    %cst = arith.constant dense<0.000000e+00> : vector<256x128xf32>
    %7 = tpu.matmul %5, %6, %cst {dimension_numbers = #tpu.dot_dimension_numbers<[1], [0], [0], [1], [0, 0, 1, 1], [], []>} : vector<256x32xf32>, vector<32x128xf32>, vector<256x128xf32> -> vector<256x128xf32>
    %c0_3 = arith.constant 0 : index
    %c0_4 = arith.constant 0 : index
    %8 = vector.load %arg3[%c0_3, %c0_4] : memref<256x128xf32, #tpu.memory_space<vmem>>, vector<256x128xf32>
    tpu.vector_store %arg3[%c0_3, %c0_4], %7 {strides = array<i32>} : memref<256x128xf32, #tpu.memory_space<vmem>>, vector<256x128xf32>,
    return
  }
  func.func @transform_0(%arg0: i32) -> (i32, i32) {
    %c0_i32 = arith.constant 0 : i32
    %c0_i32_0 = arith.constant 0 : i32
    return %arg0, %c0_i32 : i32, i32
  }
  func.func @transform_1(%arg0: i32) -> (i32, i32) {
    %c0_i32 = arith.constant 0 : i32
    %c0_i32_0 = arith.constant 0 : i32
    %c0_i32_1 = arith.constant 0 : i32
    return %c0_i32, %c0_i32_0 : i32, i32
  }
  func.func @transform_2(%arg0: i32) -> (i32, i32) {
    %c0_i32 = arith.constant 0 : i32
    %c0_i32_0 = arith.constant 0 : i32
    return %arg0, %c0_i32 : i32, i32
  }
}

</mosaic_0001>

<llo_original>
// kernel: tpu_custom_call.1
$region0: #{tpu_custom_call.1}
  #allocation0 [shape = 'u32[]', space=smem, size = 0x4, offset = 0x4, fixed_abs, tag = 'smem constant byte address 0x4 - core index']
  #allocation1 [shape = 'u32[144,128]{1,0:T(1,128)}', space=vmem, size = 0x12000, scoped, tag = 'internal scratch']
  %s0 = inlined_call_operand.vmem [shape: s32[256,1], index: 0, kind: input, shape index: {}]
  %s1 = inlined_call_operand.vmem [shape: f32[32,128], index: 1, kind: input, shape index: {}]
  %s2 = inlined_call_operand.hbm [shape: f32[256,128], index: 2, kind: output, shape index: {}]
  %s3 = sld [smem:[#allocation0]]
  $region18: #{tpu_custom_call.1} parent=0
    _
  %s5 = ssub.s32 1, %s3
  %s6 = scalar_select 0, %s5, %s3
  $region1: #{tpu_custom_call.1} parent=0
    #allocation2 [shape = 'u8[131072]{0}', space=vmem, size = 0x20000, scoped, tag = 'output window, operand 0, single buffered']
    #allocation3 [shape = 's32[1]{0}', space=sflag, size = 0x4, scoped, tag = 'scoped memory for tpu_custom_call.1']
    %7 = vsyncpa [#allocation3], 0
    // Predicated region
    $region2: #{tpu_custom_call.1} parent=1 // pred_check
      _
    $region3: #{tpu_custom_call.1} parent=1 // pred_check_branch
      %9 = sbr.rel (0) target = $region5
    $region4: #{tpu_custom_call.1} parent=1 // pred_region
      _
    $region5: #{tpu_custom_call.1} parent=1 // pred_fallthru
      _
    // Predicated region
    $region6: #{tpu_custom_call.1} parent=1 // pred_check
      _
    $region7: #{tpu_custom_call.1} parent=1 // pred_check_branch
      %11 = sbr.rel (0) target = $region9
    $region8: #{tpu_custom_call.1} parent=1 // pred_region
      _
    $region9: #{tpu_custom_call.1} parent=1 // pred_fallthru
      _
    %v12 = vld [vmem:[%s0] sm:$0xff]
    %v13 = vld [vmem:[%s0 + $0x8] sm:$0xff]
    %v14 = vld [vmem:[%s0 + $0x10] sm:$0xff]
    %v15 = vld [vmem:[%s0 + $0x18] sm:$0xff]
    %v16 = vld [vmem:[%s0 + $0x20] sm:$0xff]
    %v17 = vld [vmem:[%s0 + $0x28] sm:$0xff]
    %v18 = vld [vmem:[%s0 + $0x30] sm:$0xff]
    %v19 = vld [vmem:[%s0 + $0x38] sm:$0xff]
    %v20 = vld [vmem:[%s0 + $0x40] sm:$0xff]
    %v21 = vld [vmem:[%s0 + $0x48] sm:$0xff]
    %v22 = vld [vmem:[%s0 + $0x50] sm:$0xff]
    %v23 = vld [vmem:[%s0 + $0x58] sm:$0xff]
    %v24 = vld [vmem:[%s0 + $0x60] sm:$0xff]
    %v25 = vld [vmem:[%s0 + $0x68] sm:$0xff]
    %v26 = vld [vmem:[%s0 + $0x70] sm:$0xff]
    %v27 = vld [vmem:[%s0 + $0x78] sm:$0xff]
    %v28 = vld [vmem:[%s0 + $0x80] sm:$0xff]
    %v29 = vld [vmem:[%s0 + $0x88] sm:$0xff]
    %v30 = vld [vmem:[%s0 + $0x90] sm:$0xff]
    %v31 = vld [vmem:[%s0 + $0x98] sm:$0xff]
    %v32 = vld [vmem:[%s0 + $0xa0] sm:$0xff]
    %v33 = vld [vmem:[%s0 + $0xa8] sm:$0xff]
    %v34 = vld [vmem:[%s0 + $0xb0] sm:$0xff]
    %v35 = vld [vmem:[%s0 + $0xb8] sm:$0xff]
    %v36 = vld [vmem:[%s0 + $0xc0] sm:$0xff]
    %v37 = vld [vmem:[%s0 + $0xc8] sm:$0xff]
    %v38 = vld [vmem:[%s0 + $0xd0] sm:$0xff]
    %v39 = vld [vmem:[%s0 + $0xd8] sm:$0xff]
    %v40 = vld [vmem:[%s0 + $0xe0] sm:$0xff]
    %v41 = vld [vmem:[%s0 + $0xe8] sm:$0xff]
    %v42 = vld [vmem:[%s0 + $0xf0] sm:$0xff]
    %v43 = vld [vmem:[%s0 + $0xf8] sm:$0xff]
    %v44 = vlaneseq
    %v45 = vand.u32 %v44, 127
    %46 = vset.pattern.permute.xlu0 0
    %47 = vperm.xlu0 %46, %v12
    %v48 = vpop.permute.xlu0 %47
    %49 = vset.pattern.permute.xlu0 0
    %50 = vperm.xlu0 %49, %v13
    %v51 = vpop.permute.xlu0 %50
    %52 = vset.pattern.permute.xlu0 0
    %53 = vperm.xlu0 %52, %v14
    %v54 = vpop.permute.xlu0 %53
    %55 = vset.pattern.permute.xlu0 0
    %56 = vperm.xlu0 %55, %v15
    %v57 = vpop.permute.xlu0 %56
    %58 = vset.pattern.permute.xlu0 0
    %59 = vperm.xlu0 %58, %v16
    %v60 = vpop.permute.xlu0 %59
    %61 = vset.pattern.permute.xlu0 0
    %62 = vperm.xlu0 %61, %v17
    %v63 = vpop.permute.xlu0 %62
    %64 = vset.pattern.permute.xlu0 0
    %65 = vperm.xlu0 %64, %v18
    %v66 = vpop.permute.xlu0 %65
    %67 = vset.pattern.permute.xlu0 0
    %68 = vperm.xlu0 %67, %v19
    %v69 = vpop.permute.xlu0 %68
    %70 = vset.pattern.permute.xlu0 0
    %71 = vperm.xlu0 %70, %v20
    %v72 = vpop.permute.xlu0 %71
    %73 = vset.pattern.permute.xlu0 0
    %74 = vperm.xlu0 %73, %v21
    %v75 = vpop.permute.xlu0 %74
    %76 = vset.pattern.permute.xlu0 0
    %77 = vperm.xlu0 %76, %v22
    %v78 = vpop.permute.xlu0 %77
    %79 = vset.pattern.permute.xlu0 0
    %80 = vperm.xlu0 %79, %v23
    %v81 = vpop.permute.xlu0 %80
    %82 = vset.pattern.permute.xlu0 0
    %83 = vperm.xlu0 %82, %v24
    %v84 = vpop.permute.xlu0 %83
    %85 = vset.pattern.permute.xlu0 0
    %86 = vperm.xlu0 %85, %v25
    %v87 = vpop.permute.xlu0 %86
    %88 = vset.pattern.permute.xlu0 0
    %89 = vperm.xlu0 %88, %v26
    %v90 = vpop.permute.xlu0 %89
    %91 = vset.pattern.permute.xlu0 0
    %92 = vperm.xlu0 %91, %v27
    %v93 = vpop.permute.xlu0 %92
    %94 = vset.pattern.permute.xlu0 0
    %95 = vperm.xlu0 %94, %v28
    %v96 = vpop.permute.xlu0 %95
    %97 = vset.pattern.permute.xlu0 0
    %98 = vperm.xlu0 %97, %v29
    %v99 = vpop.permute.xlu0 %98
    %100 = vset.pattern.permute.xlu0 0
    %101 = vperm.xlu0 %100, %v30
    %v102 = vpop.permute.xlu0 %101
    %103 = vset.pattern.permute.xlu0 0
    %104 = vperm.xlu0 %103, %v31
    %v105 = vpop.permute.xlu0 %104
    %106 = vset.pattern.permute.xlu0 0
    %107 = vperm.xlu0 %106, %v32
    %v108 = vpop.permute.xlu0 %107
    %109 = vset.pattern.permute.xlu0 0
    %110 = vperm.xlu0 %109, %v33
    %v111 = vpop.permute.xlu0 %110
    %112 = vset.pattern.permute.xlu0 0
    %113 = vperm.xlu0 %112, %v34
    %v114 = vpop.permute.xlu0 %113
    %115 = vset.pattern.permute.xlu0 0
    %116 = vperm.xlu0 %115, %v35
    %v117 = vpop.permute.xlu0 %116
    %118 = vset.pattern.permute.xlu0 0
    %119 = vperm.xlu0 %118, %v36
    %v120 = vpop.permute.xlu0 %119
    %121 = vset.pattern.permute.xlu0 0
    %122 = vperm.xlu0 %121, %v37
    %v123 = vpop.permute.xlu0 %122
    %124 = vset.pattern.permute.xlu0 0
    %125 = vperm.xlu0 %124, %v38
    %v126 = vpop.permute.xlu0 %125
    %127 = vset.pattern.permute.xlu0 0
    %128 = vperm.xlu0 %127, %v39
    %v129 = vpop.permute.xlu0 %128
    %130 = vset.pattern.permute.xlu0 0
    %131 = vperm.xlu0 %130, %v40
    %v132 = vpop.permute.xlu0 %131
    %133 = vset.pattern.permute.xlu0 0
    %134 = vperm.xlu0 %133, %v41
    %v135 = vpop.permute.xlu0 %134
    %136 = vset.pattern.permute.xlu0 0
    %137 = vperm.xlu0 %136, %v42
    %v138 = vpop.permute.xlu0 %137
    %139 = vset.pattern.permute.xlu0 0
    %140 = vperm.xlu0 %139, %v43
    %v141 = vpop.permute.xlu0 %140
    %vm142 = vcmp.eq.s32.totalorder %v48, %v45
    %vm143 = vcmp.eq.s32.totalorder %v51, %v45
    %vm144 = vcmp.eq.s32.totalorder %v54, %v45
    %vm145 = vcmp.eq.s32.totalorder %v57, %v45
    %vm146 = vcmp.eq.s32.totalorder %v60, %v45
    %vm147 = vcmp.eq.s32.totalorder %v63, %v45
    %vm148 = vcmp.eq.s32.totalorder %v66, %v45
    %vm149 = vcmp.eq.s32.totalorder %v69, %v45
    %vm150 = vcmp.eq.s32.totalorder %v72, %v45
    %vm151 = vcmp.eq.s32.totalorder %v75, %v45
    %vm152 = vcmp.eq.s32.totalorder %v78, %v45
    %vm153 = vcmp.eq.s32.totalorder %v81, %v45
    %vm154 = vcmp.eq.s32.totalorder %v84, %v45
    %vm155 = vcmp.eq.s32.totalorder %v87, %v45
    %vm156 = vcmp.eq.s32.totalorder %v90, %v45
    %vm157 = vcmp.eq.s32.totalorder %v93, %v45
    %vm158 = vcmp.eq.s32.totalorder %v96, %v45
    %vm159 = vcmp.eq.s32.totalorder %v99, %v45
    %vm160 = vcmp.eq.s32.totalorder %v102, %v45
    %vm161 = vcmp.eq.s32.totalorder %v105, %v45
    %vm162 = vcmp.eq.s32.totalorder %v108, %v45
    %vm163 = vcmp.eq.s32.totalorder %v111, %v45
    %vm164 = vcmp.eq.s32.totalorder %v114, %v45
    %vm165 = vcmp.eq.s32.totalorder %v117, %v45
    %vm166 = vcmp.eq.s32.totalorder %v120, %v45
    %vm167 = vcmp.eq.s32.totalorder %v123, %v45
    %vm168 = vcmp.eq.s32.totalorder %v126, %v45
    %vm169 = vcmp.eq.s32.totalorder %v129, %v45
    %vm170 = vcmp.eq.s32.totalorder %v132, %v45
    %vm171 = vcmp.eq.s32.totalorder %v135, %v45
    %vm172 = vcmp.eq.s32.totalorder %v138, %v45
    %vm173 = vcmp.eq.s32.totalorder %v141, %v45
    %v174 = vsel %vm142, 1, 0
    %v175 = vsel %vm143, 1, 0
    %v176 = vsel %vm144, 1, 0
    %v177 = vsel %vm145, 1, 0
    %v178 = vsel %vm146, 1, 0
    %v179 = vsel %vm147, 1, 0
    %v180 = vsel %vm148, 1, 0
    %v181 = vsel %vm149, 1, 0
    %v182 = vsel %vm150, 1, 0
    %v183 = vsel %vm151, 1, 0
    %v184 = vsel %vm152, 1, 0
    %v185 = vsel %vm153, 1, 0
    %v186 = vsel %vm154, 1, 0
    %v187 = vsel %vm155, 1, 0
    %v188 = vsel %vm156, 1, 0
    %v189 = vsel %vm157, 1, 0
    %v190 = vsel %vm158, 1, 0
    %v191 = vsel %vm159, 1, 0
    %v192 = vsel %vm160, 1, 0
    %v193 = vsel %vm161, 1, 0
    %v194 = vsel %vm162, 1, 0
    %v195 = vsel %vm163, 1, 0
    %v196 = vsel %vm164, 1, 0
    %v197 = vsel %vm165, 1, 0
    %v198 = vsel %vm166, 1, 0
    %v199 = vsel %vm167, 1, 0
    %v200 = vsel %vm168, 1, 0
    %v201 = vsel %vm169, 1, 0
    %v202 = vsel %vm170, 1, 0
    %v203 = vsel %vm171, 1, 0
    %v204 = vsel %vm172, 1, 0
    %v205 = vsel %vm173, 1, 0
    %v206 = vcvt.s32.f32 %v174
    %v207 = vcvt.s32.f32 %v175
    %v208 = vcvt.s32.f32 %v176
    %v209 = vcvt.s32.f32 %v177
    %v210 = vcvt.s32.f32 %v178
    %v211 = vcvt.s32.f32 %v179
    %v212 = vcvt.s32.f32 %v180
    %v213 = vcvt.s32.f32 %v181
    %v214 = vcvt.s32.f32 %v182
    %v215 = vcvt.s32.f32 %v183
    %v216 = vcvt.s32.f32 %v184
    %v217 = vcvt.s32.f32 %v185
    %v218 = vcvt.s32.f32 %v186
    %v219 = vcvt.s32.f32 %v187
    %v220 = vcvt.s32.f32 %v188
    %v221 = vcvt.s32.f32 %v189
    %v222 = vcvt.s32.f32 %v190
    %v223 = vcvt.s32.f32 %v191
    %v224 = vcvt.s32.f32 %v192
    %v225 = vcvt.s32.f32 %v193
    %v226 = vcvt.s32.f32 %v194
    %v227 = vcvt.s32.f32 %v195
    %v228 = vcvt.s32.f32 %v196
    %v229 = vcvt.s32.f32 %v197
    %v230 = vcvt.s32.f32 %v198
    %v231 = vcvt.s32.f32 %v199
    %v232 = vcvt.s32.f32 %v200
    %v233 = vcvt.s32.f32 %v201
    %v234 = vcvt.s32.f32 %v202
    %v235 = vcvt.s32.f32 %v203
    %v236 = vcvt.s32.f32 %v204
    %v237 = vcvt.s32.f32 %v205
    %v238 = vld [vmem:[%s1] sm:$0xff]
    %v239 = vld [vmem:[%s1 + $0x8] sm:$0xff]
    %v240 = vld [vmem:[%s1 + $0x10] sm:$0xff]
    %v241 = vld [vmem:[%s1 + $0x18] sm:$0xff]
    %vm242 = vcmask 261120
    %v244 = vsel %vm242, %v206, 0
    %v247 = vsel %vm242, %v207, 0
    %v250 = vsel %vm242, %v208, 0
    %v253 = vsel %vm242, %v209, 0
    %v256 = vsel %vm242, %v210, 0
    %v259 = vsel %vm242, %v211, 0
    %v262 = vsel %vm242, %v212, 0
    %v265 = vsel %vm242, %v213, 0
    %v268 = vsel %vm242, %v214, 0
    %v271 = vsel %vm242, %v215, 0
    %v274 = vsel %vm242, %v216, 0
    %v277 = vsel %vm242, %v217, 0
    %v280 = vsel %vm242, %v218, 0
    %v283 = vsel %vm242, %v219, 0
    %v286 = vsel %vm242, %v220, 0
    %v289 = vsel %vm242, %v221, 0
    %v292 = vsel %vm242, %v222, 0
    %v295 = vsel %vm242, %v223, 0
    %v298 = vsel %vm242, %v224, 0
    %v301 = vsel %vm242, %v225, 0
    %v304 = vsel %vm242, %v226, 0
    %v307 = vsel %vm242, %v227, 0
    %v310 = vsel %vm242, %v228, 0
    %v313 = vsel %vm242, %v229, 0
    %v316 = vsel %vm242, %v230, 0
    %v319 = vsel %vm242, %v231, 0
    %v322 = vsel %vm242, %v232, 0
    %v325 = vsel %vm242, %v233, 0
    %v328 = vsel %vm242, %v234, 0
    %v331 = vsel %vm242, %v235, 0
    %v334 = vsel %vm242, %v236, 0
    %v337 = vsel %vm242, %v237, 0
    %339 = vmatprep.subr.mxu0 0.0
    %340 = vmatpush1.msra.mxu0 %v238
    %341 = vmatprep.subr.mxu0 0.0
    %342 = vmatpush1.msra.mxu0 %v239
    %343 = vmatprep.subr.mxu0 0.0
    %344 = vmatpush1.msra.mxu0 %v240
    %345 = vmatprep.subr.mxu0 0.0
    %346 = vmatpush1.msra.mxu0 %v241
    %347 = vmatprep.subr.mxu0 0.0
    %348 = vmatpush1.msra.mxu0 0.0
    %349 = vmatprep.subr.mxu0 0.0
    %350 = vmatpush1.msra.mxu0 0.0
    %351 = vmatprep.subr.mxu0 0.0
    %352 = vmatpush1.msra.mxu0 0.0
    %353 = vmatprep.subr.mxu0 0.0
    %354 = vmatpush1.msra.mxu0 0.0
    %355 = vmatprep.subr.mxu0 0.0
    %356 = vmatpush1.msra.mxu0 0.0
    %357 = vmatprep.subr.mxu0 0.0
    %358 = vmatpush1.msra.mxu0 0.0
    %359 = vmatprep.subr.mxu0 0.0
    %360 = vmatpush1.msra.mxu0 0.0
    %361 = vmatprep.subr.mxu0 0.0
    %362 = vmatpush1.msra.mxu0 0.0
    %363 = vmatprep.subr.mxu0 0.0
    %364 = vmatpush1.msra.mxu0 0.0
    %365 = vmatprep.subr.mxu0 0.0
    %366 = vmatpush1.msra.mxu0 0.0
    %367 = vmatprep.subr.mxu0 0.0
    %368 = vmatpush1.msra.mxu0 0.0
    %369 = vmatprep.subr.mxu0 0.0
    %370 = vmatpush1.msra.mxu0 0.0
    %371 = vmatprep.subr.mxu0 0.0
    %372 = vmatpush1.msra.mxu0 0.0
    %373 = vmatprep.subr.mxu0 0.0
    %374 = vmatpush1.msra.mxu0 0.0
    %375 = vmatprep.subr.mxu0 0.0
    %376 = vmatpush1.msra.mxu0 0.0
    %377 = vmatprep.subr.mxu0 0.0
    %378 = vmatpush1.msra.mxu0 0.0
    %379 = vmatprep.subr.mxu0 0.0
    %380 = vmatpush1.msra.mxu0 0.0
    %381 = vmatprep.subr.mxu0 0.0
    %382 = vmatpush1.msra.mxu0 0.0
    %383 = vmatprep.subr.mxu0 0.0
    %384 = vmatpush1.msra.mxu0 0.0
    %385 = vmatprep.subr.mxu0 0.0
    %386 = vmatpush1.msra.mxu0 0.0
    %387 = vmatprep.subr.mxu0 0.0
    %388 = vmatpush1.msra.mxu0 0.0
    %389 = vmatprep.subr.mxu0 0.0
    %390 = vmatpush1.msra.mxu0 0.0
    %391 = vmatprep.subr.mxu0 0.0
    %392 = vmatpush1.msra.mxu0 0.0
    %393 = vmatprep.subr.mxu0 0.0
    %394 = vmatpush1.msra.mxu0 0.0
    %395 = vmatprep.subr.mxu0 0.0
    %396 = vmatpush1.msra.mxu0 0.0
    %397 = vmatprep.subr.mxu0 0.0
    %398 = vmatpush1.msra.mxu0 0.0
    %399 = vmatprep.subr.mxu0 0.0
    %400 = vmatpush1.msra.mxu0 0.0
    %401 = vmatprep.subr.mxu0 0.0
    %402 = vmatpush1.msra.mxu0 0.0
    %403 = vmatprep.mubr.f32.mxu0 0.0
    %404 = vmatmul.mubr.f32.gmra.mrb[0].mxu0 %v244
    %v405 = vpop.f32.mrb[0].mxu0
    %v406 = vadd.f32 0.0, %v405
    %v407 = vpop.f32.mrb[0].mxu0
    %408 = vmatprep.mubr.f32.mxu0 0.0
    %409 = vmatmul.mubr.f32.gmra.mrb[0].mxu0 %v247
    %v410 = vpop.f32.mrb[0].mxu0
    %v411 = vadd.f32 0.0, %v410
    %v412 = vpop.f32.mrb[0].mxu0
    %413 = vmatprep.mubr.f32.mxu0 0.0
    %414 = vmatmul.mubr.f32.gmra.mrb[0].mxu0 %v250
    %v415 = vpop.f32.mrb[0].mxu0
    %v416 = vadd.f32 0.0, %v415
    %v417 = vpop.f32.mrb[0].mxu0
    %418 = vmatprep.mubr.f32.mxu0 0.0
    %419 = vmatmul.mubr.f32.gmra.mrb[0].mxu0 %v253
    %v420 = vpop.f32.mrb[0].mxu0
    %v421 = vadd.f32 0.0, %v420
    %v422 = vpop.f32.mrb[0].mxu0
    %423 = vmatprep.mubr.f32.mxu0 0.0
    %424 = vmatmul.mubr.f32.gmra.mrb[0].mxu0 %v256
    %v425 = vpop.f32.mrb[0].mxu0
    %v426 = vadd.f32 0.0, %v425
    %v427 = vpop.f32.mrb[0].mxu0
    %428 = vmatprep.mubr.f32.mxu0 0.0
    %429 = vmatmul.mubr.f32.gmra.mrb[0].mxu0 %v259
    %v430 = vpop.f32.mrb[0].mxu0
    %v431 = vadd.f32 0.0, %v430
    %v432 = vpop.f32.mrb[0].mxu0
    %433 = vmatprep.mubr.f32.mxu0 0.0
    %434 = vmatmul.mubr.f32.gmra.mrb[0].mxu0 %v262
    %v435 = vpop.f32.mrb[0].mxu0
    %v436 = vadd.f32 0.0, %v435
    %v437 = vpop.f32.mrb[0].mxu0
    %438 = vmatprep.mubr.f32.mxu0 0.0
    %439 = vmatmul.mubr.f32.gmra.mrb[0].mxu0 %v265
    %v440 = vpop.f32.mrb[0].mxu0
    %v441 = vadd.f32 0.0, %v440
    %v442 = vpop.f32.mrb[0].mxu0
    %443 = vmatprep.mubr.f32.mxu0 0.0
    %444 = vmatmul.mubr.f32.gmra.mrb[0].mxu0 %v268
    %v445 = vpop.f32.mrb[0].mxu0
    %v446 = vadd.f32 0.0, %v445
    %v447 = vpop.f32.mrb[0].mxu0
    %448 = vmatprep.mubr.f32.mxu0 0.0
    %449 = vmatmul.mubr.f32.gmra.mrb[0].mxu0 %v271
    %v450 = vpop.f32.mrb[0].mxu0
    %v451 = vadd.f32 0.0, %v450
    %v452 = vpop.f32.mrb[0].mxu0
    %453 = vmatprep.mubr.f32.mxu0 0.0
    %454 = vmatmul.mubr.f32.gmra.mrb[0].mxu0 %v274
    %v455 = vpop.f32.mrb[0].mxu0
    %v456 = vadd.f32 0.0, %v455
    %v457 = vpop.f32.mrb[0].mxu0
    %458 = vmatprep.mubr.f32.mxu0 0.0
    %459 = vmatmul.mubr.f32.gmra.mrb[0].mxu0 %v277
    %v460 = vpop.f32.mrb[0].mxu0
    %v461 = vadd.f32 0.0, %v460
    %v462 = vpop.f32.mrb[0].mxu0
    %463 = vmatprep.mubr.f32.mxu0 0.0
    %464 = vmatmul.mubr.f32.gmra.mrb[0].mxu0 %v280
    %v465 = vpop.f32.mrb[0].mxu0
    %v466 = vadd.f32 0.0, %v465
    %v467 = vpop.f32.mrb[0].mxu0
    %468 = vmatprep.mubr.f32.mxu0 0.0
    %469 = vmatmul.mubr.f32.gmra.mrb[0].mxu0 %v283
    %v470 = vpop.f32.mrb[0].mxu0
    %v471 = vadd.f32 0.0, %v470
    %v472 = vpop.f32.mrb[0].mxu0
    %473 = vmatprep.mubr.f32.mxu0 0.0
    %474 = vmatmul.mubr.f32.gmra.mrb[0].mxu0 %v286
    %v475 = vpop.f32.mrb[0].mxu0
    %v476 = vadd.f32 0.0, %v475
    %v477 = vpop.f32.mrb[0].mxu0
    %478 = vmatprep.mubr.f32.mxu0 0.0
    %479 = vmatmul.mubr.f32.gmra.mrb[0].mxu0 %v289
    %v480 = vpop.f32.mrb[0].mxu0
    %v481 = vadd.f32 0.0, %v480
    %v482 = vpop.f32.mrb[0].mxu0
    %483 = vmatprep.mubr.f32.mxu0 0.0
    %484 = vmatmul.mubr.f32.gmra.mrb[0].mxu0 %v292
    %v485 = vpop.f32.mrb[0].mxu0
    %v486 = vadd.f32 0.0, %v485
    %v487 = vpop.f32.mrb[0].mxu0
    %488 = vmatprep.mubr.f32.mxu0 0.0
    %489 = vmatmul.mubr.f32.gmra.mrb[0].mxu0 %v295
    %v490 = vpop.f32.mrb[0].mxu0
    %v491 = vadd.f32 0.0, %v490
    %v492 = vpop.f32.mrb[0].mxu0
    %493 = vmatprep.mubr.f32.mxu0 0.0
    %494 = vmatmul.mubr.f32.gmra.mrb[0].mxu0 %v298
    %v495 = vpop.f32.mrb[0].mxu0
    %v496 = vadd.f32 0.0, %v495
    %v497 = vpop.f32.mrb[0].mxu0
    %498 = vmatprep.mubr.f32.mxu0 0.0
    %499 = vmatmul.mubr.f32.gmra.mrb[0].mxu0 %v301
    %v500 = vpop.f32.mrb[0].mxu0
    %v501 = vadd.f32 0.0, %v500
    %v502 = vpop.f32.mrb[0].mxu0
    %503 = vmatprep.mubr.f32.mxu0 0.0
    %504 = vmatmul.mubr.f32.gmra.mrb[0].mxu0 %v304
    %v505 = vpop.f32.mrb[0].mxu0
    %v506 = vadd.f32 0.0, %v505
    %v507 = vpop.f32.mrb[0].mxu0
    %508 = vmatprep.mubr.f32.mxu0 0.0
    %509 = vmatmul.mubr.f32.gmra.mrb[0].mxu0 %v307
    %v510 = vpop.f32.mrb[0].mxu0
    %v511 = vadd.f32 0.0, %v510
    %v512 = vpop.f32.mrb[0].mxu0
    %513 = vmatprep.mubr.f32.mxu0 0.0
    %514 = vmatmul.mubr.f32.gmra.mrb[0].mxu0 %v310
    %v515 = vpop.f32.mrb[0].mxu0
    %v516 = vadd.f32 0.0, %v515
    %v517 = vpop.f32.mrb[0].mxu0
    %518 = vmatprep.mubr.f32.mxu0 0.0
    %519 = vmatmul.mubr.f32.gmra.mrb[0].mxu0 %v313
    %v520 = vpop.f32.mrb[0].mxu0
    %v521 = vadd.f32 0.0, %v520
    %v522 = vpop.f32.mrb[0].mxu0
    %523 = vmatprep.mubr.f32.mxu0 0.0
    %524 = vmatmul.mubr.f32.gmra.mrb[0].mxu0 %v316
    %v525 = vpop.f32.mrb[0].mxu0
    %v526 = vadd.f32 0.0, %v525
    %v527 = vpop.f32.mrb[0].mxu0
    %528 = vmatprep.mubr.f32.mxu0 0.0
    %529 = vmatmul.mubr.f32.gmra.mrb[0].mxu0 %v319
    %v530 = vpop.f32.mrb[0].mxu0
    %v531 = vadd.f32 0.0, %v530
    %v532 = vpop.f32.mrb[0].mxu0
    %533 = vmatprep.mubr.f32.mxu0 0.0
    %534 = vmatmul.mubr.f32.gmra.mrb[0].mxu0 %v322
    %v535 = vpop.f32.mrb[0].mxu0
    %v536 = vadd.f32 0.0, %v535
    %v537 = vpop.f32.mrb[0].mxu0
    %538 = vmatprep.mubr.f32.mxu0 0.0
    %539 = vmatmul.mubr.f32.gmra.mrb[0].mxu0 %v325
    %v540 = vpop.f32.mrb[0].mxu0
    %v541 = vadd.f32 0.0, %v540
    %v542 = vpop.f32.mrb[0].mxu0
    %543 = vmatprep.mubr.f32.mxu0 0.0
    %544 = vmatmul.mubr.f32.gmra.mrb[0].mxu0 %v328
    %v545 = vpop.f32.mrb[0].mxu0
    %v546 = vadd.f32 0.0, %v545
    %v547 = vpop.f32.mrb[0].mxu0
    %548 = vmatprep.mubr.f32.mxu0 0.0
    %549 = vmatmul.mubr.f32.gmra.mrb[0].mxu0 %v331
    %v550 = vpop.f32.mrb[0].mxu0
    %v551 = vadd.f32 0.0, %v550
    %v552 = vpop.f32.mrb[0].mxu0
    %553 = vmatprep.mubr.f32.mxu0 0.0
    %554 = vmatmul.mubr.f32.gmra.mrb[0].mxu0 %v334
    %v555 = vpop.f32.mrb[0].mxu0
    %v556 = vadd.f32 0.0, %v555
    %v557 = vpop.f32.mrb[0].mxu0
    %558 = vmatprep.mubr.f32.mxu0 0.0
    %559 = vmatmul.mubr.f32.gmra.mrb[0].mxu0 %v337
    %v560 = vpop.f32.mrb[0].mxu0
    %v561 = vadd.f32 0.0, %v560
    %v562 = vpop.f32.mrb[0].mxu0
    %563 = vdwg.mxu0
    %564 = vst [vmem:[#allocation2] sm:$0xff] %v406
    %565 = vst [vmem:[#allocation2 + $0x8] sm:$0xff] %v411
    %566 = vst [vmem:[#allocation2 + $0x10] sm:$0xff] %v416
    %567 = vst [vmem:[#allocation2 + $0x18] sm:$0xff] %v421
    %568 = vst [vmem:[#allocation2 + $0x20] sm:$0xff] %v426
    %569 = vst [vmem:[#allocation2 + $0x28] sm:$0xff] %v431
    %570 = vst [vmem:[#allocation2 + $0x30] sm:$0xff] %v436
    %571 = vst [vmem:[#allocation2 + $0x38] sm:$0xff] %v441
    %572 = vst [vmem:[#allocation2 + $0x40] sm:$0xff] %v446
    %573 = vst [vmem:[#allocation2 + $0x48] sm:$0xff] %v451
    %574 = vst [vmem:[#allocation2 + $0x50] sm:$0xff] %v456
    %575 = vst [vmem:[#allocation2 + $0x58] sm:$0xff] %v461
    %576 = vst [vmem:[#allocation2 + $0x60] sm:$0xff] %v466
    %577 = vst [vmem:[#allocation2 + $0x68] sm:$0xff] %v471
    %578 = vst [vmem:[#allocation2 + $0x70] sm:$0xff] %v476
    %579 = vst [vmem:[#allocation2 + $0x78] sm:$0xff] %v481
    %580 = vst [vmem:[#allocation2 + $0x80] sm:$0xff] %v486
    %581 = vst [vmem:[#allocation2 + $0x88] sm:$0xff] %v491
    %582 = vst [vmem:[#allocation2 + $0x90] sm:$0xff] %v496
    %583 = vst [vmem:[#allocation2 + $0x98] sm:$0xff] %v501
    %584 = vst [vmem:[#allocation2 + $0xa0] sm:$0xff] %v506
    %585 = vst [vmem:[#allocation2 + $0xa8] sm:$0xff] %v511
    %586 = vst [vmem:[#allocation2 + $0xb0] sm:$0xff] %v516
    %587 = vst [vmem:[#allocation2 + $0xb8] sm:$0xff] %v521
    %588 = vst [vmem:[#allocation2 + $0xc0] sm:$0xff] %v526
    %589 = vst [vmem:[#allocation2 + $0xc8] sm:$0xff] %v531
    %590 = vst [vmem:[#allocation2 + $0xd0] sm:$0xff] %v536
    %591 = vst [vmem:[#allocation2 + $0xd8] sm:$0xff] %v541
    %592 = vst [vmem:[#allocation2 + $0xe0] sm:$0xff] %v546
    %593 = vst [vmem:[#allocation2 + $0xe8] sm:$0xff] %v551
    %594 = vst [vmem:[#allocation2 + $0xf0] sm:$0xff] %v556
    %595 = vst [vmem:[#allocation2 + $0xf8] sm:$0xff] %v561
    // Predicated region
    $region10: #{tpu_custom_call.1} parent=1 // pred_check
      _
    $region11: #{tpu_custom_call.1} parent=1 // pred_check_branch
      %597 = sbr.rel (0) target = $region13
    $region12: #{tpu_custom_call.1} parent=1 // pred_region
      %s599 = ssub.s32 4096, 4096
      %600 = vsyncadd [#allocation3], %s599
      %s601 = sshll.u32 [#allocation2], 4
      %s602 = int_to_ptr.vmem [resolvable:$true] %s601
      %607 = dma.vmem_to_hbm [thread:$0]  %s602, 4096, %s2, [#allocation3], 128, 128, 8
    $region13: #{tpu_custom_call.1} parent=1 // pred_fallthru
      _
    // Predicated region
    $region14: #{tpu_custom_call.1} parent=1 // pred_check
      _
    $region15: #{tpu_custom_call.1} parent=1 // pred_check_branch
      %609 = sbr.rel (0) target = $region17
    $region16: #{tpu_custom_call.1} parent=1 // pred_region
      %610 = dma.done [#allocation3], 4096
    $region17: #{tpu_custom_call.1} parent=1 // pred_fallthru
      _
    %611 = vsyncpa [#allocation3], 1

</llo_original>
